<compile_context>
chip_gen: v5e
topology: v5e:2x2
jax: 0.10.0
libtpu: 0.0.40
codegen_flags: <defaults>
</compile_context>

<pallas_src>
from functools import partial

import jax
import jax.numpy as jnp
import numpy as np
from jax.experimental import pallas as pl
from jax.experimental.pallas import tpu as pltpu

_NEG_INF = -1e30  # finite "minus infinity" for masking padded class columns


# --------------------------------------------------------------------------
# Kernels
# --------------------------------------------------------------------------
def _matmul_step(x_ref, w_ref, acc_ref, *, w_resident: bool, tk: int):
    """One K-step of the (batch-tile x class) matmul accumulation."""
    k_idx = pl.program_id(1)

    @pl.when(k_idx == 0)
    def _init():
        acc_ref[...] = jnp.zeros_like(acc_ref)

    # f32 HBM read of x, cast to bf16 on the VPU inside the kernel (saves the
    # separate XLA cast pass over x: 8 B/elem -> 4 B/elem of HBM traffic).
    x_bf = x_ref[...].astype(jnp.bfloat16)

    if w_resident:
        # W is VMEM-resident (constant block index -> DMA'd once); slice the
        # current K-chunk in-kernel.
        start = pl.multiple_of(k_idx * tk, tk)
        w_blk = w_ref[pl.ds(start, tk), :]
    else:
        w_blk = w_ref[...]

    acc_ref[...] += jnp.dot(x_bf, w_blk, preferred_element_type=jnp.float32)


def _forward_loss_kernel(x_ref, w_ref, b_ref, cls_ref, loss_ref, acc_ref, *,
                         num_classes: int, kpad: int, label_smoothing: float,
                         w_resident: bool, tk: int):
    """K-tiled matmul accumulation; last K-step does LSE + label-smoothed CE."""
    _matmul_step(x_ref, w_ref, acc_ref, w_resident=w_resident, tk=tk)

    @pl.when(pl.program_id(1) == pl.num_programs(1) - 1)
    def _finalize():
        logits = acc_ref[...] + b_ref[...]                       # (TM, Kp) f32
        tm = logits.shape[0]
        col = jax.lax.broadcasted_iota(jnp.int32, (tm, kpad), 1)
        has_pad = num_classes != kpad                            # static
        if has_pad:
            valid = col < num_classes
            masked = jnp.where(valid, logits, _NEG_INF)
        else:
            masked = logits
        m = jnp.max(masked, axis=-1, keepdims=True)              # (TM, 1)
        e = jnp.exp(masked - m)                                  # pad cols -> 0
        lse = m + jnp.log(jnp.sum(e, axis=-1, keepdims=True))    # (TM, 1)

        labels = cls_ref[...]                                    # (TM, 1) int32
        label_logit = jnp.sum(jnp.where(col == labels, logits, 0.0),
                              axis=-1, keepdims=True)

        if label_smoothing > 0.0:
            if has_pad:
                sum_logits = jnp.sum(jnp.where(valid, logits, 0.0),
                                     axis=-1, keepdims=True)
            else:
                sum_logits = jnp.sum(logits, axis=-1, keepdims=True)
            loss = (lse - (1.0 - label_smoothing) * label_logit
                    - (label_smoothing / num_classes) * sum_logits)
        else:
            loss = lse - label_logit
        loss_ref[...] = loss


def _eval_softmax_kernel(x_ref, w_ref, b_ref, probs_ref, acc_ref, *,
                         num_classes: int, kpad: int,
                         w_resident: bool, tk: int):
    """K-tiled matmul accumulation; last K-step does masked softmax."""
    _matmul_step(x_ref, w_ref, acc_ref, w_resident=w_resident, tk=tk)

    @pl.when(pl.program_id(1) == pl.num_programs(1) - 1)
    def _finalize():
        logits = acc_ref[...] + b_ref[...]                       # (TM, Kp) f32
        tm = logits.shape[0]
        if num_classes != kpad:                                  # static
            col = jax.lax.broadcasted_iota(jnp.int32, (tm, kpad), 1)
            masked = jnp.where(col < num_classes, logits, _NEG_INF)
        else:
            masked = logits
        m = jnp.max(masked, axis=-1, keepdims=True)
        e = jnp.exp(masked - m)                                  # pad cols -> 0
        s = jnp.sum(e, axis=-1, keepdims=True)
        # approx reciprocal runs on the EUP slot instead of VALU divide.
        probs_ref[...] = e * pl.reciprocal(s, approx=True)


# --------------------------------------------------------------------------
# Model wrapper (plain-JAX glue: params, flattening, final mean)
# --------------------------------------------------------------------------
class VisionModelPallas:
    def __init__(self, in_channels, height, width, num_classes,
                 label_smoothing: float = 0.0, key=None,
                 max_batch_tile: int = 256, max_d_tile: int = 4096):
        # TODO(synk): the PyTorch base class leaves make_layers() abstract; a
        # deterministic Flatten + Linear head stands in as the concrete layers.
        self.label_smoothing = float(label_smoothing)
        self.num_classes = int(num_classes)
        self.kpad = max(128, ((num_classes + 127) // 128) * 128)  # lane-dense K
        self.max_batch_tile = int(max_batch_tile)
        self.max_d_tile = int(max_d_tile)

        d = in_channels * height * width
        self.d = d
        self.dpad = ((d + 127) // 128) * 128   # ragged D handled by zero-pad

        if key is None:
            key = jax.random.PRNGKey(0)
        kw, kb = jax.random.split(key)
        scale = 1.0 / np.sqrt(d)
        w = jax.random.uniform(kw, (d, num_classes), minval=-scale,
                               maxval=scale, dtype=jnp.float32)
        b = jax.random.uniform(kb, (1, num_classes), minval=-scale,
                               maxval=scale, dtype=jnp.float32)
        # bf16 weights; zero-padded rows (ragged D) and class columns (masked
        # inside the kernels).
        self.weight = jnp.zeros((self.dpad, self.kpad), jnp.bfloat16).at[
            :d, :num_classes].set(w.astype(jnp.bfloat16))
        self.bias = jnp.zeros((1, self.kpad), jnp.float32).at[
            :, :num_classes].set(b)

        # VMEM capacity with headroom (v7x: 64 MiB -> ~48 MiB usable budget;
        # v5e/v6e: 128 MiB -> 96 MiB). Never request the full physical VMEM.
        try:
            cap = int(pltpu.get_tpu_info().vmem_capacity_bytes)
        except Exception:
            cap = 64 * 1024 * 1024
        self.vmem_budget = (cap * 3) // 4

        # Keep W fully VMEM-resident (DMA'd once, sliced in-kernel) if it fits
        # conservatively (allow for double-buffering + other blocks).
        w_bytes = self.dpad * self.kpad * 2
        self.w_resident = 2 * w_bytes <= self.vmem_budget // 2

    # ---- tiling / compiler-param helpers ---------------------------------
    def _tiles(self, b):
        # Batch tile: 8-aligned divisor of B.
        cands = [t for t in range(8, min(b, self.max_batch_tile) + 1, 8)
                 if b % t == 0]
        if cands:
            if self.w_resident:
                # Prefer >= 2 batch programs so the "parallel" batch axis can
                # shard across the two TensorCores on v7x (re-streaming cost is
                # zero because W is resident; ~0.35us overhead on 1-TC chips).
                two = [t for t in cands if b // t >= 2]
                tm = max(two) if two else max(cands)
            else:
                # Streaming W: maximize the batch tile to minimize W re-reads.
                tm = max(cands)
        else:
            tm = b  # full-dim block is always legal (ragged / tiny batch)

        # D tile: 128-aligned divisor of dpad, capped by max_d_tile and by a
        # per-block VMEM budget for the (double-buffered) f32 x block.
        tk_cap = min(self.max_d_tile, (self.vmem_budget // 6) // (4 * tm))
        tk_cap = max(128, (tk_cap // 128) * 128)
        tk = 128
        for t in range(tk_cap, 127, -128):
            if self.dpad % t == 0:
                tk = t
                break
        return tm, tk

    def _compiler_params(self, tm, tk, out_cols):
        kp, dp = self.kpad, self.dpad
        x_bytes = tm * tk * 4                          # f32 x block
        w_bytes = dp * kp * 2 if self.w_resident else tk * kp * 2
        est = (2 * x_bytes + 2 * w_bytes + 2 * kp * 4 + 2 * tm * 4
               + 2 * tm * out_cols * 4 + tm * kp * 4)  # + f32 accumulator
        limit = int(min(self.vmem_budget,
                        max(32 * 1024 * 1024, est + (4 << 20))))
        return pltpu.CompilerParams(
            dimension_semantics=("parallel", "arbitrary"),
            vmem_limit_bytes=limit)

    def _cost(self, b, num_batch_tiles, out_cols):
        kp, dp = self.kpad, self.dpad
        w_reads = 1 if self.w_resident else num_batch_tiles
        return pl.CostEstimate(
            flops=2 * b * dp * kp,
            transcendentals=b * kp,
            bytes_accessed=(b * dp * 4 + w_reads * dp * kp * 2 + kp * 4
                            + b * 4 + b * out_cols * 4))

    def _w_spec(self, tk):
        kp, dp = self.kpad, self.dpad
        if self.w_resident:
            return pl.BlockSpec((dp, kp), lambda i, k: (0, 0))   # fetched once
        return pl.BlockSpec((tk, kp), lambda i, k: (k, 0))       # K-streamed

    def _prep_x(self, images):
        b = images.shape[0]
        x = images.reshape(b, -1).astype(jnp.float32)   # stays f32 into kernel
        if x.shape[1] != self.dpad:
            x = jnp.pad(x, ((0, 0), (0, self.dpad - x.shape[1])))
        return x

    # ---- public API -------------------------------------------------------
    def forward(self, images, classes):
        """images: (B, C, H, W); classes: (B,) int. Returns {'loss': scalar}."""
        x = self._prep_x(images)                                 # (B, Dp) f32
        b = x.shape[0]
        kp, dp = self.kpad, self.dpad
        tm, tk = self._tiles(b)
        grid = (b // tm, dp // tk)
        cls2d = classes.astype(jnp.int32).reshape(b, 1)

        per_row = pl.pallas_call(
            partial(_forward_loss_kernel, num_classes=self.num_classes,
                    kpad=kp, label_smoothing=self.label_smoothing,
                    w_resident=self.w_resident, tk=tk),
            out_shape=jax.ShapeDtypeStruct((b, 1), jnp.float32),
            grid_spec=pltpu.PrefetchScalarGridSpec(
                num_scalar_prefetch=0,
                grid=grid,
                in_specs=[
                    pl.BlockSpec((tm, tk), lambda i, k: (i, k)),   # x (f32)
                    self._w_spec(tk),                              # W (bf16)
                    pl.BlockSpec((1, kp), lambda i, k: (0, 0)),    # bias
                    pl.BlockSpec((tm, 1), lambda i, k: (i, 0)),    # classes
                ],
                out_specs=pl.BlockSpec((tm, 1), lambda i, k: (i, 0)),
                scratch_shapes=[pltpu.VMEM((tm, kp), jnp.float32)],
            ),
            compiler_params=self._compiler_params(tm, tk, 1),
            cost_estimate=self._cost(b, grid[0], 1),
        )(x, self.weight, self.bias, cls2d)

        # Tiny final mean over B per-row losses stays in plain JAX so the
        # batch grid axis can remain "parallel" (megacore-shardable).
        return {"loss": jnp.mean(per_row)}

    def eval_forward(self, images):
        """images: (B, C, H, W). Returns softmax probabilities (B, num_classes)."""
        x = self._prep_x(images)
        b = x.shape[0]
        kp, dp = self.kpad, self.dpad
        tm, tk = self._tiles(b)
        grid = (b // tm, dp // tk)

        probs = pl.pallas_call(
            partial(_eval_softmax_kernel, num_classes=self.num_classes,
                    kpad=kp, w_resident=self.w_resident, tk=tk),
            out_shape=jax.ShapeDtypeStruct((b, kp), jnp.float32),
            grid_spec=pltpu.PrefetchScalarGridSpec(
                num_scalar_prefetch=0,
                grid=grid,
                in_specs=[
                    pl.BlockSpec((tm, tk), lambda i, k: (i, k)),   # x (f32)
                    self._w_spec(tk),                              # W (bf16)
                    pl.BlockSpec((1, kp), lambda i, k: (0, 0)),    # bias
                ],
                out_specs=pl.BlockSpec((tm, kp), lambda i, k: (i, 0)),
                scratch_shapes=[pltpu.VMEM((tm, kp), jnp.float32)],
            ),
            compiler_params=self._compiler_params(tm, tk, kp),
            cost_estimate=self._cost(b, grid[0], kp),
        )(x, self.weight, self.bias)
        return probs[:, :self.num_classes]


# --------------------------------------------------------------------------
# Pure-JAX reference (for correctness check) — same bf16 operands as kernel.
# --------------------------------------------------------------------------
def _reference(model, images, classes):
    x = images.reshape(images.shape[0], -1).astype(jnp.bfloat16)
    k = model.num_classes
    w = model.weight[:model.d, :k]
    bias = model.bias[:, :k]
    logits = jnp.dot(x, w, preferred_element_type=jnp.float32) + bias
    logp = jax.nn.log_softmax(logits, axis=-1)
    onehot = jax.nn.one_hot(classes, k, dtype=jnp.float32)
    target = (1.0 - model.label_smoothing) * onehot + model.label_smoothing / k
    loss = jnp.mean(-jnp.sum(target * logp, axis=-1))
    probs = jax.nn.softmax(logits, axis=-1)
    return loss, probs


if __name__ == "__main__":
    key = jax.random.PRNGKey(0)
    k_img, k_cls, k_param = jax.random.split(key, 3)

    B, C, H, W = 8, 4, 16, 16
    NUM_CLASSES = 16

    images = jax.random.normal(k_img, (B, C, H, W), dtype=jnp.float32)
    classes = jax.random.randint(k_cls, (B,), 0, NUM_CLASSES, dtype=jnp.int32)

    # max_d_tile=512 so the D=1024 example exercises the tiled K-reduction
    # (2 accumulation steps, in-kernel W slicing) rather than one block.
    model = VisionModelPallas(C, H, W, NUM_CLASSES, label_smoothing=0.1,
                              key=k_param, max_d_tile=512)

    out = model.forward(images, classes)
    loss = jax.block_until_ready(out["loss"])
    probs = jax.block_until_ready(model.eval_forward(images))

    ref_loss, ref_probs = _reference(model, images, classes)
    assert np.allclose(np.asarray(loss), np.asarray(ref_loss),
                       rtol=1e-4, atol=1e-4), (loss, ref_loss)
    # eval softmax uses the EUP approximate reciprocal -> slightly looser tol.
    assert np.allclose(np.asarray(probs), np.asarray(ref_probs),
                       rtol=5e-3, atol=2e-3)
    assert np.allclose(np.asarray(probs).sum(axis=1), 1.0, atol=5e-3)

    print("KERNEL_OK")
</pallas_src>

<mosaic_0001>
module attributes {stable_mosaic.version = 11 : i64} {
  func.func @_forward_loss_kernel(%arg0: i32, %arg1: i32, %arg2: memref<8x512xf32, #tpu.memory_space<vmem>>, %arg3: memref<1024x128xbf16, #tpu.memory_space<vmem>>, %arg4: memref<1x128xf32, #tpu.memory_space<vmem>>, %arg5: memref<8x1xi32, #tpu.memory_space<vmem>>, %arg6: memref<8x1xf32, #tpu.memory_space<vmem>>, %arg7: memref<8x128xf32, #tpu.memory_space<vmem>>) attributes {dimension_semantics = [#tpu.dimension_semantics<parallel>, #tpu.dimension_semantics<arbitrary>], iteration_bounds = array<i64: 1, 2>, scalar_prefetch = 0 : i64, scratch_operands = 1 : i64, tpu.core_type = #tpu.core_type<tc>, window_params = [{transform_indices = @transform_0, window_bounds = array<i64: 8, 512>}, {pipeline_mode = #tpu.pipeline_mode<synchronous>, transform_indices = @transform_1, window_bounds = array<i64: 1024, 128>}, {pipeline_mode = #tpu.pipeline_mode<synchronous>, transform_indices = @transform_2, window_bounds = array<i64: 1, 128>}, {transform_indices = @transform_3, window_bounds = array<i64: 8, 1>}, {transform_indices = @transform_4, window_bounds = array<i64: 8, 1>}]} {
    %c0_i32 = arith.constant 0 : i32
    %0 = arith.cmpi eq, %arg1, %c0_i32 : i32
    %1 = arith.extui %0 : i1 to i32
    %c0_i32_0 = arith.constant 0 : i32
    %2 = arith.cmpi ne, %1, %c0_i32_0 : i32
    scf.if %2 {
      %cst_8 = arith.constant 0.000000e+00 : f32
      %16 = vector.broadcast %cst_8 : f32 to vector<8x128xf32>
      %c0_9 = arith.constant 0 : index
      %c0_10 = arith.constant 0 : index
      %17 = vector.load %arg7[%c0_9, %c0_10] : memref<8x128xf32, #tpu.memory_space<vmem>>, vector<8x128xf32>
      tpu.vector_store %arg7[%c0_9, %c0_10], %16 {strides = array<i32>} : memref<8x128xf32, #tpu.memory_space<vmem>>, vector<8x128xf32>,
    } else {
    }
    %c0 = arith.constant 0 : index
    %c0_1 = arith.constant 0 : index
    %3 = vector.load %arg2[%c0, %c0_1] : memref<8x512xf32, #tpu.memory_space<vmem>>, vector<8x512xf32>
    %4 = arith.truncf %3 : vector<8x512xf32> to vector<8x512xbf16>
    %c512_i32 = arith.constant 512 : i32
    %5 = arith.muli %arg1, %c512_i32 : i32
    %6 = tpu.assume_multiple %5, 512 : i32
    %7 = arith.index_cast %6 : i32 to index
    %c0_2 = arith.constant 0 : index
    %8 = vector.load %arg3[%7, %c0_2] : memref<1024x128xbf16, #tpu.memory_space<vmem>>, vector<512x128xbf16>
    %c0_3 = arith.constant 0 : index
    %c0_4 = arith.constant 0 : index
    %9 = vector.load %arg7[%c0_3, %c0_4] : memref<8x128xf32, #tpu.memory_space<vmem>>, vector<8x128xf32>
    %cst = arith.constant dense<0.000000e+00> : vector<8x128xf32>
    %10 = tpu.matmul %4, %8, %cst {dimension_numbers = #tpu.dot_dimension_numbers<[1], [0], [0], [1], [0, 0, 1, 1], [], []>} : vector<8x512xbf16>, vector<512x128xbf16>, vector<8x128xf32> -> vector<8x128xf32>
    %11 = arith.addf %9, %10 : vector<8x128xf32>
    %c0_5 = arith.constant 0 : index
    %c0_6 = arith.constant 0 : index
    %12 = vector.load %arg7[%c0_5, %c0_6] : memref<8x128xf32, #tpu.memory_space<vmem>>, vector<8x128xf32>
    tpu.vector_store %arg7[%c0_5, %c0_6], %11 {strides = array<i32>} : memref<8x128xf32, #tpu.memory_space<vmem>>, vector<8x128xf32>,
    %c1_i32 = arith.constant 1 : i32
    %13 = arith.cmpi eq, %arg1, %c1_i32 : i32
    %14 = arith.extui %13 : i1 to i32
    %c0_i32_7 = arith.constant 0 : i32
    %15 = arith.cmpi ne, %14, %c0_i32_7 : i32
    scf.if %15 {
      %c0_8 = arith.constant 0 : index
      %c0_9 = arith.constant 0 : index
      %16 = vector.load %arg7[%c0_8, %c0_9] : memref<8x128xf32, #tpu.memory_space<vmem>>, vector<8x128xf32>
      %c0_10 = arith.constant 0 : index
      %c0_11 = arith.constant 0 : index
      %17 = vector.load %arg4[%c0_10, %c0_11] : memref<1x128xf32, #tpu.memory_space<vmem>>, vector<1x128xf32>
      %18 = vector.broadcast %17 : vector<1x128xf32> to vector<8x128xf32>
      %19 = arith.addf %16, %18 : vector<8x128xf32>
      %20 = tpu.iota {dimensions = array<i32: 1>} : vector<8x128xi32>
      %c16_i32 = arith.constant 16 : i32
      %21 = vector.broadcast %c16_i32 : i32 to vector<8x128xi32>
      %22 = arith.cmpi slt, %20, %21 : vector<8x128xi32>
      %cst_12 = arith.constant -1.000000e+30 : f32
      %23 = vector.broadcast %cst_12 : f32 to vector<8x128xf32>
      %24 = arith.select %22, %19, %23 : vector<8x128xi1>, vector<8x128xf32>
      %cst_13 = arith.constant dense<0xFF800000> : vector<8xf32>
      %25 = vector.multi_reduction <maximumf>, %24, %cst_13 [1] : vector<8x128xf32> to vector<8xf32>
      %26 = vector.shape_cast %25 : vector<8xf32> to vector<8x1xf32>
      %27 = vector.broadcast %26 : vector<8x1xf32> to vector<8x128xf32>
      %28 = arith.subf %24, %27 : vector<8x128xf32>
      %29 = math.exp %28 : vector<8x128xf32>
      %cst_14 = arith.constant dense<0.000000e+00> : vector<8xf32>
      %30 = vector.multi_reduction <add>, %29, %cst_14 [1] : vector<8x128xf32> to vector<8xf32>
      %31 = vector.shape_cast %30 : vector<8xf32> to vector<8x1xf32>
      %32 = math.log %31 : vector<8x1xf32>
      %33 = arith.addf %26, %32 : vector<8x1xf32>
      %c0_15 = arith.constant 0 : index
      %c0_16 = arith.constant 0 : index
      %34 = vector.load %arg5[%c0_15, %c0_16] : memref<8x1xi32, #tpu.memory_space<vmem>>, vector<8x1xi32>
      %35 = vector.broadcast %34 : vector<8x1xi32> to vector<8x128xi32>
      %36 = arith.cmpi eq, %20, %35 : vector<8x128xi32>
      %cst_17 = arith.constant 0.000000e+00 : f32
      %37 = vector.broadcast %cst_17 : f32 to vector<8x128xf32>
      %38 = arith.select %36, %19, %37 : vector<8x128xi1>, vector<8x128xf32>
      %cst_18 = arith.constant dense<0.000000e+00> : vector<8xf32>
      %39 = vector.multi_reduction <add>, %38, %cst_18 [1] : vector<8x128xf32> to vector<8xf32>
      %40 = vector.shape_cast %39 : vector<8xf32> to vector<8x1xf32>
      %cst_19 = arith.constant 0.000000e+00 : f32
      %41 = vector.broadcast %cst_19 : f32 to vector<8x128xf32>
      %42 = arith.select %22, %19, %41 : vector<8x128xi1>, vector<8x128xf32>
      %cst_20 = arith.constant dense<0.000000e+00> : vector<8xf32>
      %43 = vector.multi_reduction <add>, %42, %cst_20 [1] : vector<8x128xf32> to vector<8xf32>
      %44 = vector.shape_cast %43 : vector<8xf32> to vector<8x1xf32>
      %cst_21 = arith.constant 0.899999976 : f32
      %45 = vector.broadcast %cst_21 : f32 to vector<8x1xf32>
      %46 = arith.mulf %45, %40 : vector<8x1xf32>
      %47 = arith.subf %33, %46 : vector<8x1xf32>
      %cst_22 = arith.constant 6.250000e-03 : f32
      %48 = vector.broadcast %cst_22 : f32 to vector<8x1xf32>
      %49 = arith.mulf %48, %44 : vector<8x1xf32>
      %50 = arith.subf %47, %49 : vector<8x1xf32>
      %c0_23 = arith.constant 0 : index
      %c0_24 = arith.constant 0 : index
      %51 = vector.load %arg6[%c0_23, %c0_24] : memref<8x1xf32, #tpu.memory_space<vmem>>, vector<8x1xf32>
      tpu.vector_store %arg6[%c0_23, %c0_24], %50 {strides = array<i32>} : memref<8x1xf32, #tpu.memory_space<vmem>>, vector<8x1xf32>,
    } else {
    }
    return
  }
  func.func @transform_0(%arg0: i32, %arg1: i32) -> (i32, i32) {
    %c0_i32 = arith.constant 0 : i32
    return %arg0, %arg1 : i32, i32
  }
  func.func @transform_1(%arg0: i32, %arg1: i32) -> (i32, i32) {
    %c0_i32 = arith.constant 0 : i32
    %c0_i32_0 = arith.constant 0 : i32
    %c0_i32_1 = arith.constant 0 : i32
    return %c0_i32, %c0_i32_0 : i32, i32
  }
  func.func @transform_2(%arg0: i32, %arg1: i32) -> (i32, i32) {
    %c0_i32 = arith.constant 0 : i32
    %c0_i32_0 = arith.constant 0 : i32
    %c0_i32_1 = arith.constant 0 : i32
    return %c0_i32, %c0_i32_0 : i32, i32
  }
  func.func @transform_3(%arg0: i32, %arg1: i32) -> (i32, i32) {
    %c0_i32 = arith.constant 0 : i32
    %c0_i32_0 = arith.constant 0 : i32
    return %arg0, %c0_i32 : i32, i32
  }
  func.func @transform_4(%arg0: i32, %arg1: i32) -> (i32, i32) {
    %c0_i32 = arith.constant 0 : i32
    %c0_i32_0 = arith.constant 0 : i32
    return %arg0, %c0_i32 : i32, i32
  }
}

</mosaic_0001>

<llo_original>
// kernel: tpu_custom_call.1
$region0: #{tpu_custom_call.1}
  #allocation0 [shape = 'u32[]', space=smem, size = 0x4, offset = 0x4, fixed_abs, tag = 'smem constant byte address 0x4 - core index']
  #allocation1 [shape = 'u32[72,128]{1,0:T(1,128)}', space=vmem, size = 0x9000, scoped, tag = 'internal scratch']
  #allocation2 [shape = 'f32[8,128]{1,0:T(8,128)}', space=vmem, size = 0x1000, scoped, tag = 'scratch operand']
  %s0 = inlined_call_operand.hbm [shape: f32[8,1024], index: 0, kind: input, shape index: {}]
  %s1 = inlined_call_operand.hbm [shape: bf16[1024,128], index: 1, kind: input, shape index: {}]
  %s2 = inlined_call_operand.vmem [shape: f32[1,128], index: 2, kind: input, shape index: {}]
  %s3 = inlined_call_operand.vmem [shape: s32[8,1], index: 3, kind: input, shape index: {}]
  %s4 = inlined_call_operand.vmem [shape: f32[8,1], index: 4, kind: output, shape index: {}]
  %s5 = sld [smem:[#allocation0]]
  $region65: #{tpu_custom_call.1} parent=0
    _
  %s7 = ssub.s32 1, %s5
  %s8 = scalar_select 0, %s7, %s5
  $region1: #{tpu_custom_call.1} parent=0
    #allocation3 [shape = 'u8[32768]{0}', space=vmem, size = 0x8000, scoped, tag = 'input window, operand 0']
    #allocation4 [shape = 's32[2]{0}', space=sflag, size = 0x8, scoped, tag = 'scoped memory for tpu_custom_call.1']
    #allocation5 [shape = 'u8[262144]{0}', space=vmem, size = 0x40000, scoped, tag = 'input window, operand 1, single buffered']
    #allocation6 [shape = 's32[1]{0}', space=sflag, size = 0x4, scoped, tag = 'scoped memory for tpu_custom_call.1']
    %9 = vsyncpa [#allocation4], 0
    %s10 = scalar_lea.sflag [#allocation4], 1
    %11 = vsyncpa %s10, 0
    %12 = vsyncpa [#allocation6], 0
    loop: start=0, step=1, limit=4
    $region2: #{tpu_custom_call.1} parent=1 // loop_pre_header
      _
    $region3: #{tpu_custom_call.1} parent=1 // loop_header
      %s14 = sphi 0, %s18
      %p15 = scmp.ge.s32.totalorder %s14, 4
      %s21 = sphi 0, %s33
      %s22 = sphi 0, %s29
      %s23 = sphi 0, %s21
      %s24 = sphi 0, %s22
      %s25 = sphi 0, %s23
      %s26 = sphi 0, %s24
      %s38 = sphi 0, %s40
      %s41 = sphi 0, %s38
      %s42 = sphi 0, %s41
      %s58 = sphi 0, %s42
      %s62 = sphi 0, %s62
      %s64 = sphi 0, %s62
      %s65 = sphi 0, %s64
      %s79 = sphi 0, %s65
      %s83 = sphi 0, %s83
      %s85 = sphi 0, %s83
      %s86 = sphi 0, %s85
      %s100 = sphi 0, %s86
      %s106 = sphi 0, %s108
      %s109 = sphi 0, %s106
      %s110 = sphi 0, %s109
      %s126 = sphi 0, %s110
      %s132 = sphi 0, %s134
      %s135 = sphi 0, %s132
      %s136 = sphi 0, %s135
      %s152 = sphi 0, %s136
    $region4: #{tpu_custom_call.1} parent=1 // loop_header_branch
      %17 = sbr.rel (%p15) target = $region8
    $region5: #{tpu_custom_call.1} parent=1 // loop_body
      %s19 = ssub.s32 %s14, 1
      %s20 = ssub.s32 %s14, 2
      %s27 = sadd.s32 1, %s22
      %p28 = scmp.ge.s32.totalorder %s27, 2
      %s29 = scalar_select %p28, 0, %s27
      %s30 = sadd.s32 1, %s21
      %s31 = scalar_select %p28, %s30, %s21
      %p32 = scmp.ge.s32.totalorder %s31, 1
      %s33 = scalar_select %p32, 0, %s31
      %s34 = ssub.s32 %s21, %s33
      %s35 = ssub.s32 %s22, %s29
      %s36 = sor.u32 %s34, %s35
      %p37 = scmp.eq.s32.totalorder %s36, 0
      %s39 = sadd.s32 %s38, 1
      %s40 = scalar_select %p37, %s38, %s39
      %p43 = pneg %p37
      %p44 = scmp.eq.s32.totalorder %s14, 1
      %p45 = por %p43, %p44
      %p46 = scmp.ne.s32.totalorder %s38, %s41
      %p47 = scmp.eq.s32.totalorder %s14, 0
      %p48 = por %p46, %p47
      %p49 = scmp.ne.s32.totalorder %s38, %s41
      %p50 = scmp.eq.s32.totalorder %s19, 1
      %p51 = por %p49, %p50
      %p52 = scmp.ne.s32.totalorder %s41, %s42
      %p53 = scmp.eq.s32.totalorder %s19, 0
      %p54 = por %p52, %p53
      %p55 = scmp.ne.s32.totalorder %s41, %s42
      %p56 = scmp.eq.s32.totalorder %s20, 1
      %p57 = por %p55, %p56
      %p59 = scmp.ne.s32.totalorder %s42, %s58
      %p60 = scmp.eq.s32.totalorder %s20, 0
      %p61 = por %p59, %p60
      %s63 = sadd.s32 %s62, 1
      %p66 = scmp.eq.s32.totalorder %s14, 1
      %p67 = scmp.ne.s32.totalorder %s62, %s64
      %p68 = scmp.eq.s32.totalorder %s14, 0
      %p69 = por %p67, %p68
      %p70 = scmp.ne.s32.totalorder %s62, %s64
      %p71 = scmp.eq.s32.totalorder %s19, 1
      %p72 = por %p70, %p71
      %p73 = scmp.ne.s32.totalorder %s64, %s65
      %p74 = scmp.eq.s32.totalorder %s19, 0
      %p75 = por %p73, %p74
      %p76 = scmp.ne.s32.totalorder %s64, %s65
      %p77 = scmp.eq.s32.totalorder %s20, 1
      %p78 = por %p76, %p77
      %p80 = scmp.ne.s32.totalorder %s65, %s79
      %p81 = scmp.eq.s32.totalorder %s20, 0
      %p82 = por %p80, %p81
      %s84 = sadd.s32 %s83, 1
      %p87 = scmp.eq.s32.totalorder %s14, 1
      %p88 = scmp.ne.s32.totalorder %s83, %s85
      %p89 = scmp.eq.s32.totalorder %s14, 0
      %p90 = por %p88, %p89
      %p91 = scmp.ne.s32.totalorder %s83, %s85
      %p92 = scmp.eq.s32.totalorder %s19, 1
      %p93 = por %p91, %p92
      %p94 = scmp.ne.s32.totalorder %s85, %s86
      %p95 = scmp.eq.s32.totalorder %s19, 0
      %p96 = por %p94, %p95
      %p97 = scmp.ne.s32.totalorder %s85, %s86
      %p98 = scmp.eq.s32.totalorder %s20, 1
      %p99 = por %p97, %p98
      %p101 = scmp.ne.s32.totalorder %s86, %s100
      %p102 = scmp.eq.s32.totalorder %s20, 0
      %p103 = por %p101, %p102
      %s104 = ssub.s32 %s21, %s33
      %p105 = scmp.eq.s32.totalorder %s104, 0
      %s107 = sadd.s32 %s106, 1
      %s108 = scalar_select %p105, %s106, %s107
      %p111 = pneg %p105
      %p112 = scmp.eq.s32.totalorder %s14, 1
      %p113 = por %p111, %p112
      %p114 = scmp.ne.s32.totalorder %s106, %s109
      %p115 = scmp.eq.s32.totalorder %s14, 0
      %p116 = por %p114, %p115
      %p117 = scmp.ne.s32.totalorder %s106, %s109
      %p118 = scmp.eq.s32.totalorder %s19, 1
      %p119 = por %p117, %p118
      %p120 = scmp.ne.s32.totalorder %s109, %s110
      %p121 = scmp.eq.s32.totalorder %s19, 0
      %p122 = por %p120, %p121
      %p123 = scmp.ne.s32.totalorder %s109, %s110
      %p124 = scmp.eq.s32.totalorder %s20, 1
      %p125 = por %p123, %p124
      %p127 = scmp.ne.s32.totalorder %s110, %s126
      %p128 = scmp.eq.s32.totalorder %s20, 0
      %p129 = por %p127, %p128
      %s130 = ssub.s32 %s21, %s33
      %p131 = scmp.eq.s32.totalorder %s130, 0
      %s133 = sadd.s32 %s132, 1
      %s134 = scalar_select %p131, %s132, %s133
      %p137 = pneg %p131
      %p138 = scmp.eq.s32.totalorder %s14, 1
      %p139 = por %p137, %p138
      %p140 = scmp.ne.s32.totalorder %s132, %s135
      %p141 = scmp.eq.s32.totalorder %s14, 0
      %p142 = por %p140, %p141
      %p143 = scmp.ne.s32.totalorder %s132, %s135
      %p144 = scmp.eq.s32.totalorder %s19, 1
      %p145 = por %p143, %p144
      %p146 = scmp.ne.s32.totalorder %s135, %s136
      %p147 = scmp.eq.s32.totalorder %s19, 0
      %p148 = por %p146, %p147
      %p149 = scmp.ne.s32.totalorder %s135, %s136
      %p150 = scmp.eq.s32.totalorder %s20, 1
      %p151 = por %p149, %p150
      %p153 = scmp.ne.s32.totalorder %s136, %s152
      %p154 = scmp.eq.s32.totalorder %s20, 0
      %p155 = por %p153, %p154
      %p156 = scmp.le.s32.totalorder 1, %s14
      %p157 = scmp.lt.s32.totalorder %s14, 3
      %p158 = pnand %p156, %p157
      %p159 = pneg %p158
      // Predicated region
      $region9: #{tpu_custom_call.1} parent=5 // pred_check
        _
      $region10: #{tpu_custom_call.1} parent=5 // pred_check_branch
        %161 = sbr.rel (%p158) target = $region12
      $region11: #{tpu_custom_call.1} parent=5 // pred_region
        %s162 = ssub.s32 %s14, 1
        // Predicated region
        $region13: #{tpu_custom_call.1} parent=11 // pred_check
          %p163 = pneg %p75
        $region14: #{tpu_custom_call.1} parent=11 // pred_check_branch
          %165 = sbr.rel (%p163) target = $region16
        $region15: #{tpu_custom_call.1} parent=11 // pred_region
          %167 = vsyncadd [#allocation6], 0
          %s168 = sshll.u32 %s1, 4
          %s169 = int_to_ptr.hbm [resolvable:$true] %s168
          %s170 = sshll.u32 [#allocation5], 4
          %s171 = int_to_ptr.vmem [resolvable:$true] %s170
          %176 = dma.hbm_to_vmem [thread:$0]  %s169, 8192, %s171, [#allocation6], 64, 64, 4
        $region16: #{tpu_custom_call.1} parent=11 // pred_fallthru
          _
        // Predicated region
        $region17: #{tpu_custom_call.1} parent=11 // pred_check
          %p177 = pneg %p96
        $region18: #{tpu_custom_call.1} parent=11 // pred_check_branch
          %179 = sbr.rel (%p177) target = $region20
        $region19: #{tpu_custom_call.1} parent=11 // pred_region
          _
        $region20: #{tpu_custom_call.1} parent=11 // pred_fallthru
          _
        // Predicated region
        $region21: #{tpu_custom_call.1} parent=11 // pred_check
          %p180 = pneg %p122
        $region22: #{tpu_custom_call.1} parent=11 // pred_check_branch
          %182 = sbr.rel (%p180) target = $region24
        $region23: #{tpu_custom_call.1} parent=11 // pred_region
          %p183 = scmp.lt.s32.totalorder %s23, 0
          %s184 = scalar_select %p183, %s23, 0
          %s185 = smul.addr %s184, 8
          %s186 = scalar_lea.vmem %s3, %s185
        $region24: #{tpu_custom_call.1} parent=11 // pred_fallthru
          _
      $region12: #{tpu_custom_call.1} parent=5 // pred_fallthru
        _
      %p187 = scmp.lt.s32.totalorder %s14, 2
      // Predicated region
      $region25: #{tpu_custom_call.1} parent=5 // pred_check
        %p188 = pneg %p187
      $region26: #{tpu_custom_call.1} parent=5 // pred_check_branch
        %190 = sbr.rel (%p188) target = $region28
      $region27: #{tpu_custom_call.1} parent=5 // pred_region
        // Predicated region
        $region29: #{tpu_custom_call.1} parent=27 // pred_check
          %p191 = pneg %p48
        $region30: #{tpu_custom_call.1} parent=27 // pred_check_branch
          %193 = sbr.rel (%p191) target = $region32
        $region31: #{tpu_custom_call.1} parent=27 // pred_region
          %s194 = sand.u32 %s38, 1
          %s195 = scalar_lea.sflag [#allocation4], %s194
          %s196 = sand.u32 %s38, 1
          %s197 = smul.addr %s196, 32
          %s198 = scalar_lea.vmem [#allocation3], %s197
          %s199 = smul.u32 4, %s22
          %201 = vsyncadd %s195, 0
          %s202 = smul.addr %s21, 8
          %s203 = sadd.s32 %s199, %s202
          %s204 = smul.addr %s203, 8
          %s205 = scalar_lea.hbm %s0, %s204
          %s207 = sshll.u32 %s205, 4
          %s208 = int_to_ptr.hbm [resolvable:$true] %s207
          %s209 = sshll.u32 %s198, 4
          %s210 = int_to_ptr.vmem [resolvable:$true] %s209
          %212 = dma.hbm_to_vmem [thread:$0]  %s208, 512, %s210, %s195
        $region32: #{tpu_custom_call.1} parent=27 // pred_fallthru
          _
      $region28: #{tpu_custom_call.1} parent=5 // pred_fallthru
        _
      %p213 = scmp.le.s32.totalorder 1, %s14
      %p214 = scmp.lt.s32.totalorder %s14, 3
      %p215 = pnand %p213, %p214
      %p216 = pneg %p215
      // Predicated region
      $region33: #{tpu_custom_call.1} parent=5 // pred_check
        _
      $region34: #{tpu_custom_call.1} parent=5 // pred_check_branch
        %218 = sbr.rel (%p215) target = $region36
      $region35: #{tpu_custom_call.1} parent=5 // pred_region
        %s219 = ssub.s32 %s14, 1
        %s220 = sand.u32 %s41, 1
        %s221 = scalar_lea.sflag [#allocation4], %s220
        %s222 = sand.u32 %s41, 1
        %s223 = smul.addr %s222, 32
        %s224 = scalar_lea.vmem [#allocation3], %s223
        // Predicated region
        $region37: #{tpu_custom_call.1} parent=35 // pred_check
          %p225 = pneg %p54
        $region38: #{tpu_custom_call.1} parent=35 // pred_check_branch
          %227 = sbr.rel (%p225) target = $region40
        $region39: #{tpu_custom_call.1} parent=35 // pred_region
          %229 = dma.done %s221, 512
        $region40: #{tpu_custom_call.1} parent=35 // pred_fallthru
          _
        // Predicated region
        $region41: #{tpu_custom_call.1} parent=35 // pred_check
          %p230 = pneg %p75
        $region42: #{tpu_custom_call.1} parent=35 // pred_check_branch
          %232 = sbr.rel (%p230) target = $region44
        $region43: #{tpu_custom_call.1} parent=35 // pred_region
          %234 = dma.done [#allocation6], 8192
        $region44: #{tpu_custom_call.1} parent=35 // pred_fallthru
          _
        %s235 = sand.u32 %s41, 1
        %s236 = scalar_lea.sflag [#allocation4], %s235
        %s237 = sand.u32 %s41, 1
        %s238 = smul.addr %s237, 32
        %s239 = scalar_lea.vmem [#allocation3], %s238
        %p240 = pneg %p54
        %p241 = pneg %p51
        %p242 = pneg %p75
        %p243 = pneg %p72
        %p244 = pneg %p96
        %p245 = pneg %p93
        %p246 = scmp.lt.s32.totalorder %s23, 0
        %s247 = scalar_select %p246, %s23, 0
        %s248 = smul.addr %s247, 8
        %s249 = scalar_lea.vmem %s3, %s248
        %p250 = pneg %p122
        %p251 = pneg %p119
        %p252 = pneg %p148
        %p253 = pneg %p145
        %p254 = scmp.lt.s32.totalorder %s23, 0
        %s255 = scalar_select %p254, %s23, 0
        %s256 = smul.addr %s255, 8
        %s257 = scalar_lea.vmem %s4, %s256
        %s258 = smul.u32 4, %s24
        %p259 = scmp.lt.s32.totalorder %s23, 0
        %s260 = scalar_select %p259, %s23, 0
        %s261 = smul.addr %s260, 8
        %s262 = scalar_lea.vmem %s3, %s261
        %p263 = scmp.lt.s32.totalorder %s23, 0
        %s264 = scalar_select %p263, %s23, 0
        %s265 = smul.addr %s264, 8
        %s266 = scalar_lea.vmem %s4, %s265
        %p267 = scmp.eq.s32.totalorder %s24, 0
        // Predicated region
        $region45: #{tpu_custom_call.1} parent=35 // pred_check
          %p268 = pneg %p267
        $region46: #{tpu_custom_call.1} parent=35 // pred_check_branch
          %270 = sbr.rel (%p268) target = $region48
        $region47: #{tpu_custom_call.1} parent=35 // pred_region
          %271 = vst [vmem:[#allocation2] sm:$0xff] 0.0
        $region48: #{tpu_custom_call.1} parent=35 // pred_fallthru
          _
        %v272 = vld [vmem:[%s224] sm:$0xff]
        %v273 = vld [vmem:[%s224 + $0x8] sm:$0xff]
        %v274 = vld [vmem:[%s224 + $0x10] sm:$0xff]
        %v275 = vld [vmem:[%s224 + $0x18] sm:$0xff]
        %v276 = vpack.c.bf16 %v272, %v272
        %v277 = vpack.c.bf16 %v273, %v273
        %v278 = vpack.c.bf16 %v274, %v274
        %v279 = vpack.c.bf16 %v275, %v275
        %s280 = smul.u32 %s24, 512
        %s281 = sshra.s32 %s280, 3
        %s282 = sand.u32 %s280, 7
        %s283 = smul.addr %s281, 4
        %s284 = scalar_lea.vmem [#allocation5], %s283
        %v285 = vld [vmem:[%s284] sm:$0xf]
        %v286 = vld [vmem:[%s284 + $0x4] sm:$0xf]
        %v287 = vld [vmem:[%s284 + $0x8] sm:$0xf]
        %v288 = vld [vmem:[%s284 + $0xc] sm:$0xf]
        %v289 = vld [vmem:[%s284 + $0x10] sm:$0xf]
        %v290 = vld [vmem:[%s284 + $0x14] sm:$0xf]
        %v291 = vld [vmem:[%s284 + $0x18] sm:$0xf]
        %v292 = vld [vmem:[%s284 + $0x1c] sm:$0xf]
        %v293 = vld [vmem:[%s284 + $0x20] sm:$0xf]
        %v294 = vld [vmem:[%s284 + $0x24] sm:$0xf]
        %v295 = vld [vmem:[%s284 + $0x28] sm:$0xf]
        %v296 = vld [vmem:[%s284 + $0x2c] sm:$0xf]
        %v297 = vld [vmem:[%s284 + $0x30] sm:$0xf]
        %v298 = vld [vmem:[%s284 + $0x34] sm:$0xf]
        %v299 = vld [vmem:[%s284 + $0x38] sm:$0xf]
        %v300 = vld [vmem:[%s284 + $0x3c] sm:$0xf]
        %v301 = vld [vmem:[%s284 + $0x40] sm:$0xf]
        %v302 = vld [vmem:[%s284 + $0x44] sm:$0xf]
        %v303 = vld [vmem:[%s284 + $0x48] sm:$0xf]
        %v304 = vld [vmem:[%s284 + $0x4c] sm:$0xf]
        %v305 = vld [vmem:[%s284 + $0x50] sm:$0xf]
        %v306 = vld [vmem:[%s284 + $0x54] sm:$0xf]
        %v307 = vld [vmem:[%s284 + $0x58] sm:$0xf]
        %v308 = vld [vmem:[%s284 + $0x5c] sm:$0xf]
        %v309 = vld [vmem:[%s284 + $0x60] sm:$0xf]
        %v310 = vld [vmem:[%s284 + $0x64] sm:$0xf]
        %v311 = vld [vmem:[%s284 + $0x68] sm:$0xf]
        %v312 = vld [vmem:[%s284 + $0x6c] sm:$0xf]
        %v313 = vld [vmem:[%s284 + $0x70] sm:$0xf]
        %v314 = vld [vmem:[%s284 + $0x74] sm:$0xf]
        %v315 = vld [vmem:[%s284 + $0x78] sm:$0xf]
        %v316 = vld [vmem:[%s284 + $0x7c] sm:$0xf]
        %v317 = vld [vmem:[%s284 + $0x80] sm:$0xf]
        %v318 = vld [vmem:[%s284 + $0x84] sm:$0xf]
        %v319 = vld [vmem:[%s284 + $0x88] sm:$0xf]
        %v320 = vld [vmem:[%s284 + $0x8c] sm:$0xf]
        %v321 = vld [vmem:[%s284 + $0x90] sm:$0xf]
        %v322 = vld [vmem:[%s284 + $0x94] sm:$0xf]
        %v323 = vld [vmem:[%s284 + $0x98] sm:$0xf]
        %v324 = vld [vmem:[%s284 + $0x9c] sm:$0xf]
        %v325 = vld [vmem:[%s284 + $0xa0] sm:$0xf]
        %v326 = vld [vmem:[%s284 + $0xa4] sm:$0xf]
        %v327 = vld [vmem:[%s284 + $0xa8] sm:$0xf]
        %v328 = vld [vmem:[%s284 + $0xac] sm:$0xf]
        %v329 = vld [vmem:[%s284 + $0xb0] sm:$0xf]
        %v330 = vld [vmem:[%s284 + $0xb4] sm:$0xf]
        %v331 = vld [vmem:[%s284 + $0xb8] sm:$0xf]
        %v332 = vld [vmem:[%s284 + $0xbc] sm:$0xf]
        %v333 = vld [vmem:[%s284 + $0xc0] sm:$0xf]
        %v334 = vld [vmem:[%s284 + $0xc4] sm:$0xf]
        %v335 = vld [vmem:[%s284 + $0xc8] sm:$0xf]
        %v336 = vld [vmem:[%s284 + $0xcc] sm:$0xf]
        %v337 = vld [vmem:[%s284 + $0xd0] sm:$0xf]
        %v338 = vld [vmem:[%s284 + $0xd4] sm:$0xf]
        %v339 = vld [vmem:[%s284 + $0xd8] sm:$0xf]
        %v340 = vld [vmem:[%s284 + $0xdc] sm:$0xf]
        %v341 = vld [vmem:[%s284 + $0xe0] sm:$0xf]
        %v342 = vld [vmem:[%s284 + $0xe4] sm:$0xf]
        %v343 = vld [vmem:[%s284 + $0xe8] sm:$0xf]
        %v344 = vld [vmem:[%s284 + $0xec] sm:$0xf]
        %v345 = vld [vmem:[%s284 + $0xf0] sm:$0xf]
        %v346 = vld [vmem:[%s284 + $0xf4] sm:$0xf]
        %v347 = vld [vmem:[%s284 + $0xf8] sm:$0xf]
        %v348 = vld [vmem:[%s284 + $0xfc] sm:$0xf]
        %v349 = vld [vmem:[#allocation2] sm:$0xff]
        %v414 = vunpack.c.l.b16 %v285
        %v415 = vunpack.c.l.b16 %v286
        %v416 = vunpack.c.l.b16 %v287
        %v417 = vunpack.c.l.b16 %v288
        %v418 = vunpack.c.l.b16 %v289
        %v419 = vunpack.c.l.b16 %v290
        %v420 = vunpack.c.l.b16 %v291
        %v421 = vunpack.c.l.b16 %v292
        %v422 = vunpack.c.l.b16 %v293
        %v423 = vunpack.c.l.b16 %v294
        %v424 = vunpack.c.l.b16 %v295
        %v425 = vunpack.c.l.b16 %v296
        %v426 = vunpack.c.l.b16 %v297
        %v427 = vunpack.c.l.b16 %v298
        %v428 = vunpack.c.l.b16 %v299
        %v429 = vunpack.c.l.b16 %v300
        %v430 = vunpack.c.l.b16 %v301
        %v431 = vunpack.c.l.b16 %v302
        %v432 = vunpack.c.l.b16 %v303
        %v433 = vunpack.c.l.b16 %v304
        %v434 = vunpack.c.l.b16 %v305
        %v435 = vunpack.c.l.b16 %v306
        %v436 = vunpack.c.l.b16 %v307
        %v437 = vunpack.c.l.b16 %v308
        %v438 = vunpack.c.l.b16 %v309
        %v439 = vunpack.c.l.b16 %v310
        %v440 = vunpack.c.l.b16 %v311
        %v441 = vunpack.c.l.b16 %v312
        %v442 = vunpack.c.l.b16 %v313
        %v443 = vunpack.c.l.b16 %v314
        %v444 = vunpack.c.l.b16 %v315
        %v445 = vunpack.c.l.b16 %v316
        %v446 = vunpack.c.l.b16 %v317
        %v447 = vunpack.c.l.b16 %v318
        %v448 = vunpack.c.l.b16 %v319
        %v449 = vunpack.c.l.b16 %v320
        %v450 = vunpack.c.l.b16 %v321
        %v451 = vunpack.c.l.b16 %v322
        %v452 = vunpack.c.l.b16 %v323
        %v453 = vunpack.c.l.b16 %v324
        %v454 = vunpack.c.l.b16 %v325
        %v455 = vunpack.c.l.b16 %v326
        %v456 = vunpack.c.l.b16 %v327
        %v457 = vunpack.c.l.b16 %v328
        %v458 = vunpack.c.l.b16 %v329
        %v459 = vunpack.c.l.b16 %v330
        %v460 = vunpack.c.l.b16 %v331
        %v461 = vunpack.c.l.b16 %v332
        %v462 = vunpack.c.l.b16 %v333
        %v463 = vunpack.c.l.b16 %v334
        %v464 = vunpack.c.l.b16 %v335
        %v465 = vunpack.c.l.b16 %v336
        %v466 = vunpack.c.l.b16 %v337
        %v467 = vunpack.c.l.b16 %v338
        %v468 = vunpack.c.l.b16 %v339
        %v469 = vunpack.c.l.b16 %v340
        %v470 = vunpack.c.l.b16 %v341
        %v471 = vunpack.c.l.b16 %v342
        %v472 = vunpack.c.l.b16 %v343
        %v473 = vunpack.c.l.b16 %v344
        %v474 = vunpack.c.l.b16 %v345
        %v475 = vunpack.c.l.b16 %v346
        %v476 = vunpack.c.l.b16 %v347
        %v477 = vunpack.c.l.b16 %v348
        %v478 = vpack.c.b16 %v415, %v414
        %v479 = vpack.c.b16 %v417, %v416
        %v480 = vpack.c.b16 %v419, %v418
        %v481 = vpack.c.b16 %v421, %v420
        %v482 = vpack.c.b16 %v423, %v422
        %v483 = vpack.c.b16 %v425, %v424
        %v484 = vpack.c.b16 %v427, %v426
        %v485 = vpack.c.b16 %v429, %v428
        %v486 = vpack.c.b16 %v431, %v430
        %v487 = vpack.c.b16 %v433, %v432
        %v488 = vpack.c.b16 %v435, %v434
        %v489 = vpack.c.b16 %v437, %v436
        %v490 = vpack.c.b16 %v439, %v438
        %v491 = vpack.c.b16 %v441, %v440
        %v492 = vpack.c.b16 %v443, %v442
        %v493 = vpack.c.b16 %v445, %v444
        %v494 = vpack.c.b16 %v447, %v446
        %v495 = vpack.c.b16 %v449, %v448
        %v496 = vpack.c.b16 %v451, %v450
        %v497 = vpack.c.b16 %v453, %v452
        %v498 = vpack.c.b16 %v455, %v454
        %v499 = vpack.c.b16 %v457, %v456
        %v500 = vpack.c.b16 %v459, %v458
        %v501 = vpack.c.b16 %v461, %v460
        %v502 = vpack.c.b16 %v463, %v462
        %v503 = vpack.c.b16 %v465, %v464
        %v504 = vpack.c.b16 %v467, %v466
        %v505 = vpack.c.b16 %v469, %v468
        %v506 = vpack.c.b16 %v471, %v470
        %v507 = vpack.c.b16 %v473, %v472
        %v508 = vpack.c.b16 %v475, %v474
        %v509 = vpack.c.b16 %v477, %v476
        %542 = vmatpush.bf16.msra.mxu0 %v485
        %543 = vmatpush.bf16.msra.mxu0 %v484
        %544 = vmatpush.bf16.msra.mxu0 %v483
        %545 = vmatpush.bf16.msra.mxu0 %v482
        %546 = vmatpush.bf16.msra.mxu0 %v481
        %547 = vmatpush.bf16.msra.mxu0 %v480
        %548 = vmatpush.bf16.msra.mxu0 %v479
        %549 = vmatpush.bf16.msra.mxu0 %v478
        %550 = vmatmul.bf16.gmra.mxu0 %v276
        %v551 = vpop.f32.mrf.mxu0
        %v552 = vadd.f32 0.0, %v551
        %v553 = vpop.f32.mrf.mxu0
        %554 = vdwg.mxu0
        %555 = vmatpush.bf16.msra.mxu0 %v493
        %556 = vmatpush.bf16.msra.mxu0 %v492
        %557 = vmatpush.bf16.msra.mxu0 %v491
        %558 = vmatpush.bf16.msra.mxu0 %v490
        %559 = vmatpush.bf16.msra.mxu0 %v489
        %560 = vmatpush.bf16.msra.mxu0 %v488
        %561 = vmatpush.bf16.msra.mxu0 %v487
        %562 = vmatpush.bf16.msra.mxu0 %v486
        %563 = vmatmul.bf16.gmra.mxu0 %v277
        %v564 = vpop.f32.mrf.mxu0
        %v565 = vadd.f32 %v552, %v564
        %v566 = vpop.f32.mrf.mxu0
        %567 = vdwg.mxu0
        %568 = vmatpush.bf16.msra.mxu0 %v501
        %569 = vmatpush.bf16.msra.mxu0 %v500
        %570 = vmatpush.bf16.msra.mxu0 %v499
        %571 = vmatpush.bf16.msra.mxu0 %v498
        %572 = vmatpush.bf16.msra.mxu0 %v497
        %573 = vmatpush.bf16.msra.mxu0 %v496
        %574 = vmatpush.bf16.msra.mxu0 %v495
        %575 = vmatpush.bf16.msra.mxu0 %v494
        %576 = vmatmul.bf16.gmra.mxu0 %v278
        %v577 = vpop.f32.mrf.mxu0
        %v578 = vadd.f32 %v565, %v577
        %v579 = vpop.f32.mrf.mxu0
        %580 = vdwg.mxu0
        %581 = vmatpush.bf16.msra.mxu0 %v509
        %582 = vmatpush.bf16.msra.mxu0 %v508
        %583 = vmatpush.bf16.msra.mxu0 %v507
        %584 = vmatpush.bf16.msra.mxu0 %v506
        %585 = vmatpush.bf16.msra.mxu0 %v505
        %586 = vmatpush.bf16.msra.mxu0 %v504
        %587 = vmatpush.bf16.msra.mxu0 %v503
        %588 = vmatpush.bf16.msra.mxu0 %v502
        %589 = vmatmul.bf16.gmra.mxu0 %v279
        %v590 = vpop.f32.mrf.mxu0
        %v591 = vadd.f32 %v578, %v590
        %v592 = vpop.f32.mrf.mxu0
        %593 = vdwg.mxu0
        %v594 = vadd.f32 %v349, %v591
        %595 = vst [vmem:[#allocation2] sm:$0xff] %v594
        %p596 = scmp.eq.s32.totalorder %s24, 1
        // Predicated region
        $region49: #{tpu_custom_call.1} parent=35 // pred_check
          %p597 = pneg %p596
        $region50: #{tpu_custom_call.1} parent=35 // pred_check_branch
          %599 = sbr.rel (%p597) target = $region52
        $region51: #{tpu_custom_call.1} parent=35 // pred_region
          %v600 = vld [vmem:[#allocation2] sm:$0xff]
          %v601 = vld [vmem:[%s2] sm:$0x1]
          %v603 = vperm.slane %v601, 0
          %v605 = vadd.f32 %v600, %v603
          %v606 = vlaneseq
          %v607 = vand.u32 %v606, 127
          %vm608 = vcmp.lt.s32.totalorder %v607, 16
          %v609 = vsel %vm608, %v605, -1e+30
          %610 = vmax.xlane.f32.xlu0 %v609
          %v611 = vpop.xlane.xlu0 %610
          %v612 = vsub.f32 %v609, %v611
          %v613 = vmul.f32 %v612, 1.442695
          %v614 = vpow.pop %v613
          %615 = vadd.xlane.f32.xlu0 %v614
          %v616 = vpop.xlane.xlu0 %615
          %v617 = vlog2.pop %v616
          %v618 = vmul.f32 %v617, 0.6931472
          %v619 = vadd.f32 %v611, %v618
          %v620 = vld [vmem:[%s262] sm:$0xff]
          %621 = vset.pattern.permute.xlu0 0
          %622 = vperm.xlu0 %621, %v620
          %v623 = vpop.permute.xlu0 %622
          %vm624 = vcmp.eq.s32.totalorder %v607, %v623
          %v625 = vsel %vm624, %v605, 0.0
          %626 = vadd.xlane.f32.xlu0 %v625
          %v627 = vpop.xlane.xlu0 %626
          %v628 = vsel %vm608, %v605, 0.0
          %629 = vadd.xlane.f32.xlu0 %v628
          %v630 = vpop.xlane.xlu0 %629
          %v631 = vmul.f32 %v627, 0.9
          %v632 = vsub.f32 %v619, %v631
          %v633 = vmul.f32 %v630, 0.00625
          %v634 = vsub.f32 %v632, %v633
          %vm635 = vcmask 7168
          %636 = vst.msk [vmem:[%s266] sm:$0xff] %vm635, %v634
        $region52: #{tpu_custom_call.1} parent=35 // pred_fallthru
          _
        %p637 = scmp.lt.s32.totalorder %s23, 0
        %s638 = scalar_select %p637, %s23, 0
        %s639 = smul.addr %s638, 8
        %s640 = scalar_lea.vmem %s4, %s639
        // Predicated region
        $region53: #{tpu_custom_call.1} parent=35 // pred_check
          %p641 = pneg %p145
        $region54: #{tpu_custom_call.1} parent=35 // pred_check_branch
          %643 = sbr.rel (%p641) target = $region56
        $region55: #{tpu_custom_call.1} parent=35 // pred_region
          _
        $region56: #{tpu_custom_call.1} parent=35 // pred_fallthru
          _
        // Predicated region
        $region57: #{tpu_custom_call.1} parent=35 // pred_check
          %p644 = pneg %p145
        $region58: #{tpu_custom_call.1} parent=35 // pred_check_branch
          %646 = sbr.rel (%p644) target = $region60
        $region59: #{tpu_custom_call.1} parent=35 // pred_region
          %p647 = scmp.lt.s32.totalorder %s23, 0
          %s648 = scalar_select %p647, %s23, 0
          %s649 = smul.addr %s648, 8
          %s650 = scalar_lea.vmem %s4, %s649
        $region60: #{tpu_custom_call.1} parent=35 // pred_fallthru
          _
      $region36: #{tpu_custom_call.1} parent=5 // pred_fallthru
        _
      %p651 = scmp.le.s32.totalorder 2, %s14
      // Predicated region
      $region61: #{tpu_custom_call.1} parent=5 // pred_check
        %p652 = pneg %p651
      $region62: #{tpu_custom_call.1} parent=5 // pred_check_branch
        %654 = sbr.rel (%p652) target = $region64
      $region63: #{tpu_custom_call.1} parent=5 // pred_region
        %s655 = ssub.s32 %s14, 2
      $region64: #{tpu_custom_call.1} parent=5 // pred_fallthru
        _
    $region6: #{tpu_custom_call.1} parent=1 // loop_footer
      %s18 = sadd.s32 1, %s14
    $region7: #{tpu_custom_call.1} parent=1 // loop_footer_branch
      %13 = sbr.rel target = $region3
    $region8: #{tpu_custom_call.1} parent=1 // loop_exit
      _
    %656 = vsyncpa [#allocation4], 1
    %s657 = scalar_lea.sflag [#allocation4], 1
    %658 = vsyncpa %s657, 1
    %659 = vsyncpa [#allocation6], 1

</llo_original>
